<compile_context>
chip_gen: v6e
topology: v6e:2x2x1
jax: 0.10.0
libtpu: 0.0.40
codegen_flags: <defaults>
</compile_context>

<pallas_src>
import functools

import jax
import jax.numpy as jnp
from jax.experimental import pallas as pl
from jax.experimental.pallas import tpu as pltpu


# --------------------------------------------------------------------------
# Shared in-kernel gate math (VPU/XLU; C and C//r are tiny).
# --------------------------------------------------------------------------
def _gate_from_pooled(pooled_f32, w1, b1, w2t, b2):
    """pooled_f32: (B, C) f32 -> sigmoid gate (B, C) f32.

    w1  : (Cr, C)   first 1x1 conv weight (C on the lane axis)
    b1  : (1, Cr)
    w2t : (Cr, C)   transposed second 1x1 conv weight (C on the lane axis)
    b2  : (1, C)
    """
    h = jnp.sum(pooled_f32[:, None, :] * w1[None, :, :], axis=-1) + b1   # (B, Cr)
    h = jnp.maximum(h, 0.0)
    g = jnp.sum(h[:, :, None] * w2t[None, :, :], axis=1) + b2            # (B, C)
    return jax.nn.sigmoid(g)


# --------------------------------------------------------------------------
# Path 1: fused single-pass kernel — one (Bt, C, HW) slab per grid step.
# --------------------------------------------------------------------------
def _ca_fused_kernel(x_ref, w1_ref, b1_ref, w2t_ref, b2_ref, o_ref):
    hw = x_ref.shape[-1]
    inv_hw = 1.0 / float(hw)

    # AdaptiveAvgPool2d(1): lane-axis reduce with f32 accumulation.
    # Index x_ref directly (no slab-sized Python temp kept alive).
    pooled = jnp.sum(x_ref[...], axis=-1, dtype=jnp.float32) * inv_hw     # (Bt, C)

    gate = _gate_from_pooled(pooled, w1_ref[...], b1_ref[...],
                             w2t_ref[...], b2_ref[...])                   # (Bt, C) f32

    # Channel-wise rescale.  Narrow dtypes multiply in f32 (matches the f32
    # reference; free on v5e where the VPU has no bf16 path anyway).
    if o_ref.dtype == jnp.float32:
        o_ref[...] = x_ref[...] * gate[:, :, None]
    else:
        o_ref[...] = (x_ref[...].astype(jnp.float32)
                      * gate[:, :, None]).astype(o_ref.dtype)


def _pick_block_batch(N, C, HW, itemsize, *, target_block_bytes=1 << 20,
                      min_grid_steps=8):
    """Largest divisor of N keeping blocks ~target_block_bytes AND giving at
    least min(min_grid_steps, N) grid steps (real pipelining + megacore)."""
    row_bytes = max(1, C * HW * itemsize)
    bt_cap = max(1, target_block_bytes // row_bytes)
    steps_target = min(min_grid_steps, N)
    bt_cap = min(bt_cap, max(1, N // steps_target))
    bt = 1
    for d in range(1, min(N, bt_cap) + 1):
        if N % d == 0:
            bt = d
    return bt


def _ca_fused(x_flat, w1f, b1r, w2t, b2r, *, N, C, Cr, HW, itemsize, usable,
              block_batch):
    if block_batch is None:
        block_batch = _pick_block_batch(N, C, HW, itemsize)
    Bt = int(block_batch)
    assert N % Bt == 0, f"block_batch={Bt} must divide batch size N={N}"
    grid = (N // Bt,)

    block_bytes = Bt * C * HW * itemsize
    narrow = itemsize < 4
    # double-buffered in + out (+ one f32 upcast temp for narrow dtypes)
    resident = (6 if narrow else 5) * block_bytes + (2 << 20)
    vmem_limit = int(min(usable, max(32 << 20, resident)))

    return pl.pallas_call(
        _ca_fused_kernel,
        out_shape=jax.ShapeDtypeStruct((N, C, HW), x_flat.dtype),
        grid_spec=pltpu.PrefetchScalarGridSpec(
            num_scalar_prefetch=0,
            grid=grid,
            in_specs=[
                pl.BlockSpec((Bt, C, HW), lambda b: (b, 0, 0)),
                pl.BlockSpec((Cr, C), lambda b: (0, 0)),
                pl.BlockSpec((1, Cr), lambda b: (0, 0)),
                pl.BlockSpec((Cr, C), lambda b: (0, 0)),
                pl.BlockSpec((1, C), lambda b: (0, 0)),
            ],
            out_specs=pl.BlockSpec((Bt, C, HW), lambda b: (b, 0, 0)),
        ),
        compiler_params=pltpu.CompilerParams(
            dimension_semantics=("parallel",),
            vmem_limit_bytes=vmem_limit),
    )(x_flat, w1f, b1r, w2t, b2r)


# --------------------------------------------------------------------------
# Path 2: two-phase fallback — pool+gate over HW tiles, then parallel rescale.
# --------------------------------------------------------------------------
def _ca_pool_gate_kernel(x_ref, w1_ref, b1_ref, w2t_ref, b2_ref, gate_ref,
                         acc_ref, *, inv_hw):
    k = pl.program_id(1)

    @pl.when(k == 0)
    def _():
        acc_ref[...] = jnp.zeros_like(acc_ref)

    # Partial pooled sum over this HW tile (f32 accumulation).
    acc_ref[...] += jnp.sum(x_ref[...], axis=-1, dtype=jnp.float32)      # (1, C)

    @pl.when(k == pl.num_programs(1) - 1)
    def _():
        pooled = acc_ref[...] * inv_hw                                   # (1, C)
        gate = _gate_from_pooled(pooled, w1_ref[...], b1_ref[...],
                                 w2t_ref[...], b2_ref[...])              # (1, C)
        gate_ref[...] = gate[:, :, None]                                 # (1, C, 1)


def _ca_rescale_kernel(x_ref, gate_ref, o_ref):
    gate = gate_ref[...]                                                 # (1, C, 1) f32
    if o_ref.dtype == jnp.float32:
        o_ref[...] = x_ref[...] * gate
    else:
        o_ref[...] = (x_ref[...].astype(jnp.float32) * gate).astype(o_ref.dtype)


def _pick_hw_tile(HW, C, itemsize, *, target_block_bytes=1 << 20):
    """Largest multiple-of-128 divisor of HW that leaves >= 2 HW blocks and
    keeps a (1, C, tile) block under target size.  Falls back to whole HW."""
    candidates = [t for t in range(128, HW // 2 + 1, 128) if HW % t == 0]
    if not candidates:
        return HW
    fitting = [t for t in candidates if C * t * itemsize <= target_block_bytes]
    return max(fitting) if fitting else min(candidates)


def _ca_split(x_flat, w1f, b1r, w2t, b2r, *, N, C, Cr, HW, itemsize, usable):
    hw_tile = _pick_hw_tile(HW, C, itemsize)
    hw_blocks = HW // hw_tile
    tile_bytes = C * hw_tile * itemsize
    vmem_limit = int(min(usable, max(32 << 20, 8 * tile_bytes + (2 << 20))))

    # Phase 1: pooled mean + gate per batch element (HW axis = reduction).
    gate = pl.pallas_call(
        functools.partial(_ca_pool_gate_kernel, inv_hw=1.0 / float(HW)),
        out_shape=jax.ShapeDtypeStruct((N, C, 1), jnp.float32),
        grid_spec=pltpu.PrefetchScalarGridSpec(
            num_scalar_prefetch=0,
            grid=(N, hw_blocks),
            in_specs=[
                pl.BlockSpec((1, C, hw_tile), lambda n, k: (n, 0, k)),
                pl.BlockSpec((Cr, C), lambda n, k: (0, 0)),
                pl.BlockSpec((1, Cr), lambda n, k: (0, 0)),
                pl.BlockSpec((Cr, C), lambda n, k: (0, 0)),
                pl.BlockSpec((1, C), lambda n, k: (0, 0)),
            ],
            out_specs=pl.BlockSpec((1, C, 1), lambda n, k: (n, 0, 0)),
            scratch_shapes=[pltpu.VMEM((1, C), jnp.float32)],
        ),
        compiler_params=pltpu.CompilerParams(
            dimension_semantics=("parallel", "arbitrary"),
            vmem_limit_bytes=vmem_limit),
    )(x_flat, w1f, b1r, w2t, b2r)

    # Phase 2: rescale — fully parallel over (batch, HW tiles), so even N==1
    # shards across both v7x TensorCores.
    out_flat = pl.pallas_call(
        _ca_rescale_kernel,
        out_shape=jax.ShapeDtypeStruct((N, C, HW), x_flat.dtype),
        grid_spec=pltpu.PrefetchScalarGridSpec(
            num_scalar_prefetch=0,
            grid=(N, hw_blocks),
            in_specs=[
                pl.BlockSpec((1, C, hw_tile), lambda n, k: (n, 0, k)),
                pl.BlockSpec((1, C, 1), lambda n, k: (n, 0, 0)),
            ],
            out_specs=pl.BlockSpec((1, C, hw_tile), lambda n, k: (n, 0, k)),
        ),
        compiler_params=pltpu.CompilerParams(
            dimension_semantics=("parallel", "parallel"),
            vmem_limit_bytes=vmem_limit),
    )(x_flat, gate)
    return out_flat


# --------------------------------------------------------------------------
# Wrapper
# --------------------------------------------------------------------------
def _vmem_capacity_bytes():
    try:
        return int(pltpu.get_tpu_info().vmem_capacity_bytes)
    except Exception:
        return 64 << 20   # conservative fallback (v7x per-TensorCore VMEM)


def ca_layer(x, w1, b1, w2, b2, *, block_batch=None, force_split=None):
    """Channel-attention layer (PyTorch CALayer forward).

    x  : (N, C, H, W)
    w1 : (C//r, C)   -- 1x1 conv weight, squeezed from (C//r, C, 1, 1)
    b1 : (C//r,)
    w2 : (C, C//r)   -- 1x1 conv weight, squeezed from (C, C//r, 1, 1)
    b2 : (C,)
    """
    N, C, H, W = x.shape
    Cr = w1.shape[0]
    HW = H * W

    # Lane-dense layout: flatten spatial dims (free row-major reshape).
    x_flat = x.reshape(N, C, HW)
    w1f = jnp.asarray(w1, jnp.float32)                 # (Cr, C)
    w2t = jnp.asarray(w2, jnp.float32).T               # (Cr, C)
    b1r = jnp.asarray(b1, jnp.float32).reshape(1, Cr)
    b2r = jnp.asarray(b2, jnp.float32).reshape(1, C)

    itemsize = jnp.dtype(x.dtype).itemsize
    cap = _vmem_capacity_bytes()
    usable = max(16 << 20, cap - (8 << 20))            # compiler headroom

    row_bytes = C * HW * itemsize
    narrow = itemsize < 4
    fused_need = (6 if narrow else 5) * row_bytes + (2 << 20)
    fits_fused = fused_need <= usable

    # On small-VMEM (v7x-like, 2-TC) parts a single huge batch element would
    # otherwise leave one core idle on a memory-bound op: split over HW.
    small_vmem = cap <= (64 << 20)
    want_hw_parallel = (N == 1 and small_vmem and HW % 128 == 0
                        and HW >= 256 and row_bytes >= (4 << 20))

    use_split = (not fits_fused) or want_hw_parallel
    if force_split is not None:
        use_split = bool(force_split)

    if use_split:
        out_flat = _ca_split(x_flat, w1f, b1r, w2t, b2r, N=N, C=C, Cr=Cr,
                             HW=HW, itemsize=itemsize, usable=usable)
    else:
        out_flat = _ca_fused(x_flat, w1f, b1r, w2t, b2r, N=N, C=C, Cr=Cr,
                             HW=HW, itemsize=itemsize, usable=usable,
                             block_batch=block_batch)
    return out_flat.reshape(N, C, H, W)


def ca_layer_ref(x, w1, b1, w2, b2):
    """Pure-JAX reference (mirrors the PyTorch forward)."""
    xf = x.astype(jnp.float32)
    pooled = jnp.mean(xf, axis=(2, 3))                       # (N, C)
    h = jnp.maximum(pooled @ w1.T + b1, 0.0)                 # (N, C//r)
    gate = jax.nn.sigmoid(h @ w2.T + b2)                     # (N, C)
    return (xf * gate[:, :, None, None]).astype(x.dtype)


if __name__ == "__main__":
    # Module hyper-params: channel=16, reduction=8 -> hidden = 2
    N, C, H, W = 2, 16, 16, 16
    reduction = 8
    Cr = C // reduction

    key = jax.random.PRNGKey(0)
    kx, k1, k2, k3, k4 = jax.random.split(key, 5)

    x = jax.random.normal(kx, (N, C, H, W), dtype=jnp.float32)
    w1 = jax.random.normal(k1, (Cr, C), dtype=jnp.float32) * 0.1   # (C//r, C)
    b1 = jax.random.normal(k2, (Cr,), dtype=jnp.float32) * 0.1
    w2 = jax.random.normal(k3, (C, Cr), dtype=jnp.float32) * 0.1   # (C, C//r)
    b2 = jax.random.normal(k4, (C,), dtype=jnp.float32) * 0.1

    ref = ca_layer_ref(x, w1, b1, w2, b2)

    # Primary fused path.
    out = jax.block_until_ready(ca_layer(x, w1, b1, w2, b2))
    assert out.shape == (N, C, H, W)
    assert jnp.allclose(out, ref, atol=1e-5, rtol=1e-5), (
        f"fused max abs err = {jnp.max(jnp.abs(out - ref))}")

    # Also exercise the two-phase fallback (used for slabs that cannot be
    # double-buffered in VMEM, e.g. on v7x, or N==1 megacore splitting).
    out_split = jax.block_until_ready(
        ca_layer(x, w1, b1, w2, b2, force_split=True))
    assert jnp.allclose(out_split, ref, atol=1e-5, rtol=1e-5), (
        f"split max abs err = {jnp.max(jnp.abs(out_split - ref))}")

    print("KERNEL_OK")
</pallas_src>

<mosaic_0001>
module attributes {stable_mosaic.version = 11 : i64} {
  func.func @_ca_fused_kernel(%arg0: i32, %arg1: memref<1x16x256xf32, #tpu.memory_space<vmem>>, %arg2: memref<2x16xf32, #tpu.memory_space<vmem>>, %arg3: memref<1x2xf32, #tpu.memory_space<vmem>>, %arg4: memref<2x16xf32, #tpu.memory_space<vmem>>, %arg5: memref<1x16xf32, #tpu.memory_space<vmem>>, %arg6: memref<1x16x256xf32, #tpu.memory_space<vmem>>) attributes {dimension_semantics = [#tpu.dimension_semantics<parallel>], iteration_bounds = array<i64: 2>, scalar_prefetch = 0 : i64, scratch_operands = 0 : i64, tpu.core_type = #tpu.core_type<tc>, window_params = [{transform_indices = @transform_0, window_bounds = array<i64: 1, 16, 256>}, {pipeline_mode = #tpu.pipeline_mode<synchronous>, transform_indices = @transform_1, window_bounds = array<i64: 2, 16>}, {pipeline_mode = #tpu.pipeline_mode<synchronous>, transform_indices = @transform_2, window_bounds = array<i64: 1, 2>}, {pipeline_mode = #tpu.pipeline_mode<synchronous>, transform_indices = @transform_3, window_bounds = array<i64: 2, 16>}, {pipeline_mode = #tpu.pipeline_mode<synchronous>, transform_indices = @transform_4, window_bounds = array<i64: 1, 16>}, {transform_indices = @transform_5, window_bounds = array<i64: 1, 16, 256>}]} {
    %c0 = arith.constant 0 : index
    %c0_0 = arith.constant 0 : index
    %c0_1 = arith.constant 0 : index
    %0 = vector.load %arg1[%c0, %c0_0, %c0_1] : memref<1x16x256xf32, #tpu.memory_space<vmem>>, vector<1x16x256xf32>
    %cst = arith.constant dense<0.000000e+00> : vector<1x16xf32>
    %1 = vector.multi_reduction <add>, %0, %cst [2] : vector<1x16x256xf32> to vector<1x16xf32>
    %cst_2 = arith.constant 3.906250e-03 : f32
    %2 = vector.broadcast %cst_2 : f32 to vector<1x16xf32>
    %3 = arith.mulf %1, %2 : vector<1x16xf32>
    %c0_3 = arith.constant 0 : index
    %c0_4 = arith.constant 0 : index
    %4 = vector.load %arg2[%c0_3, %c0_4] : memref<2x16xf32, #tpu.memory_space<vmem>>, vector<2x16xf32>
    %c0_5 = arith.constant 0 : index
    %c0_6 = arith.constant 0 : index
    %5 = vector.load %arg3[%c0_5, %c0_6] : memref<1x2xf32, #tpu.memory_space<vmem>>, vector<1x2xf32>
    %c0_7 = arith.constant 0 : index
    %c0_8 = arith.constant 0 : index
    %6 = vector.load %arg4[%c0_7, %c0_8] : memref<2x16xf32, #tpu.memory_space<vmem>>, vector<2x16xf32>
    %c0_9 = arith.constant 0 : index
    %c0_10 = arith.constant 0 : index
    %7 = vector.load %arg5[%c0_9, %c0_10] : memref<1x16xf32, #tpu.memory_space<vmem>>, vector<1x16xf32>
    %8 = vector.shape_cast %3 : vector<1x16xf32> to vector<1x1x16xf32>
    %9 = vector.shape_cast %4 : vector<2x16xf32> to vector<1x2x16xf32>
    %10 = vector.broadcast %8 : vector<1x1x16xf32> to vector<1x2x16xf32>
    %11 = arith.mulf %10, %9 : vector<1x2x16xf32>
    %cst_11 = arith.constant dense<0.000000e+00> : vector<1x2xf32>
    %12 = vector.multi_reduction <add>, %11, %cst_11 [2] : vector<1x2x16xf32> to vector<1x2xf32>
    %13 = arith.addf %12, %5 : vector<1x2xf32>
    %cst_12 = arith.constant 0.000000e+00 : f32
    %14 = vector.broadcast %cst_12 : f32 to vector<1x2xf32>
    %15 = arith.maximumf %13, %14 : vector<1x2xf32>
    %16 = vector.shape_cast %15 : vector<1x2xf32> to vector<1x2x1xf32>
    %17 = vector.shape_cast %6 : vector<2x16xf32> to vector<1x2x16xf32>
    %18 = vector.broadcast %16 : vector<1x2x1xf32> to vector<1x2x16xf32>
    %19 = arith.mulf %18, %17 : vector<1x2x16xf32>
    %cst_13 = arith.constant dense<0.000000e+00> : vector<1x16xf32>
    %20 = vector.multi_reduction <add>, %19, %cst_13 [1] : vector<1x2x16xf32> to vector<1x16xf32>
    %21 = arith.addf %20, %7 : vector<1x16xf32>
    %22 = arith.negf %21 : vector<1x16xf32>
    %23 = math.exp %22 : vector<1x16xf32>
    %cst_14 = arith.constant 1.000000e+00 : f32
    %24 = vector.broadcast %cst_14 : f32 to vector<1x16xf32>
    %25 = arith.addf %24, %23 : vector<1x16xf32>
    %26 = arith.divf %24, %25 : vector<1x16xf32>
    %c0_15 = arith.constant 0 : index
    %c0_16 = arith.constant 0 : index
    %c0_17 = arith.constant 0 : index
    %27 = vector.load %arg1[%c0_15, %c0_16, %c0_17] : memref<1x16x256xf32, #tpu.memory_space<vmem>>, vector<1x16x256xf32>
    %28 = vector.shape_cast %26 : vector<1x16xf32> to vector<1x16x1xf32>
    %29 = vector.broadcast %28 : vector<1x16x1xf32> to vector<1x16x256xf32>
    %30 = arith.mulf %27, %29 : vector<1x16x256xf32>
    %c0_18 = arith.constant 0 : index
    %c0_19 = arith.constant 0 : index
    %c0_20 = arith.constant 0 : index
    %31 = vector.load %arg6[%c0_18, %c0_19, %c0_20] : memref<1x16x256xf32, #tpu.memory_space<vmem>>, vector<1x16x256xf32>
    tpu.vector_store %arg6[%c0_18, %c0_19, %c0_20], %30 {strides = array<i32>} : memref<1x16x256xf32, #tpu.memory_space<vmem>>, vector<1x16x256xf32>,
    return
  }
  func.func @transform_0(%arg0: i32) -> (i32, i32, i32) {
    %c0_i32 = arith.constant 0 : i32
    %c0_i32_0 = arith.constant 0 : i32
    %c0_i32_1 = arith.constant 0 : i32
    return %arg0, %c0_i32, %c0_i32_0 : i32, i32, i32
  }
  func.func @transform_1(%arg0: i32) -> (i32, i32) {
    %c0_i32 = arith.constant 0 : i32
    %c0_i32_0 = arith.constant 0 : i32
    %c0_i32_1 = arith.constant 0 : i32
    return %c0_i32, %c0_i32_0 : i32, i32
  }
  func.func @transform_2(%arg0: i32) -> (i32, i32) {
    %c0_i32 = arith.constant 0 : i32
    %c0_i32_0 = arith.constant 0 : i32
    %c0_i32_1 = arith.constant 0 : i32
    return %c0_i32, %c0_i32_0 : i32, i32
  }
  func.func @transform_3(%arg0: i32) -> (i32, i32) {
    %c0_i32 = arith.constant 0 : i32
    %c0_i32_0 = arith.constant 0 : i32
    %c0_i32_1 = arith.constant 0 : i32
    return %c0_i32, %c0_i32_0 : i32, i32
  }
  func.func @transform_4(%arg0: i32) -> (i32, i32) {
    %c0_i32 = arith.constant 0 : i32
    %c0_i32_0 = arith.constant 0 : i32
    %c0_i32_1 = arith.constant 0 : i32
    return %c0_i32, %c0_i32_0 : i32, i32
  }
  func.func @transform_5(%arg0: i32) -> (i32, i32, i32) {
    %c0_i32 = arith.constant 0 : i32
    %c0_i32_0 = arith.constant 0 : i32
    %c0_i32_1 = arith.constant 0 : i32
    return %arg0, %c0_i32, %c0_i32_0 : i32, i32, i32
  }
}

</mosaic_0001>

<llo_original>
// kernel: tpu_custom_call.1
$region0: #{tpu_custom_call.1}
  #allocation0 [shape = 'u32[]', space=smem, size = 0x4, offset = 0x4, fixed_abs, tag = 'smem constant byte address 0x4 - core index']
  #allocation1 [shape = 'u32[144,128]{1,0:T(1,128)}', space=vmem, size = 0x12000, scoped, tag = 'internal scratch']
  %s0 = inlined_call_operand.hbm [shape: f32[2,16,256], index: 0, kind: input, shape index: {}]
  %s1 = inlined_call_operand.hbm [shape: f32[2,16], index: 1, kind: input, shape index: {}]
  %s2 = inlined_call_operand.vmem [shape: f32[1,2], index: 2, kind: input, shape index: {}]
  %s3 = inlined_call_operand.vmem [shape: f32[2,16], index: 3, kind: input, shape index: {}]
  %s4 = inlined_call_operand.vmem [shape: f32[1,16], index: 4, kind: input, shape index: {}]
  %s5 = inlined_call_operand.hbm [shape: f32[2,16,256], index: 5, kind: output, shape index: {}]
  %s6 = sld [smem:[#allocation0]]
  $region61: #{tpu_custom_call.1} parent=0
    _
  %s8 = ssub.s32 1, %s6
  %s9 = scalar_select 0, %s8, %s6
  $region1: #{tpu_custom_call.1} parent=0
    #allocation2 [shape = 'u8[32768]{0}', space=vmem, size = 0x8000, scoped, tag = 'input window, operand 0']
    #allocation3 [shape = 's32[2]{0}', space=sflag, size = 0x8, scoped, tag = 'scoped memory for tpu_custom_call.1']
    #allocation4 [shape = 's32[2]{0}', space=sflag, size = 0x8, scoped, tag = 'scoped memory for tpu_custom_call.1']
    #allocation5 [shape = 'u8[1024]{0}', space=vmem, size = 0x400, scoped, tag = 'input window, operand 1, single buffered']
    #allocation6 [shape = 's32[1]{0}', space=sflag, size = 0x4, scoped, tag = 'scoped memory for tpu_custom_call.1']
    #allocation7 [shape = 'u8[32768]{0}', space=vmem, size = 0x8000, scoped, tag = 'output window, operand 0']
    %10 = vsyncpa [#allocation3], 0
    %s11 = scalar_lea.sflag [#allocation3], 1
    %12 = vsyncpa %s11, 0
    %13 = vsyncpa [#allocation6], 0
    %14 = vsyncpa [#allocation4], 0
    %s15 = scalar_lea.sflag [#allocation4], 1
    %16 = vsyncpa %s15, 0
    loop: start=0, step=1, limit=4
    $region2: #{tpu_custom_call.1} parent=1 // loop_pre_header
      _
    $region3: #{tpu_custom_call.1} parent=1 // loop_header
      %s18 = sphi 0, %s22
      %p19 = scmp.ge.s32.totalorder %s18, 4
      %s28 = sphi 0, %s30
      %s31 = sphi 0, %s28
      %s32 = sphi 0, %s31
      %s48 = sphi 0, %s32
      %s52 = sphi 0, %s52
      %s54 = sphi 0, %s52
      %s55 = sphi 0, %s54
      %s69 = sphi 0, %s55
      %s73 = sphi 0, %s73
      %s75 = sphi 0, %s73
      %s76 = sphi 0, %s75
      %s90 = sphi 0, %s76
      %s94 = sphi 0, %s94
      %s96 = sphi 0, %s94
      %s97 = sphi 0, %s96
      %s111 = sphi 0, %s97
      %s115 = sphi 0, %s115
      %s117 = sphi 0, %s115
      %s118 = sphi 0, %s117
      %s132 = sphi 0, %s118
      %s138 = sphi 0, %s140
      %s141 = sphi 0, %s138
      %s142 = sphi 0, %s141
      %s158 = sphi 0, %s142
    $region4: #{tpu_custom_call.1} parent=1 // loop_header_branch
      %21 = sbr.rel (%p19) target = $region8
    $region5: #{tpu_custom_call.1} parent=1 // loop_body
      %s23 = ssub.s32 %s18, 1
      %s24 = ssub.s32 %s18, 2
      %s25 = sadd.s32 %s18, 1
      %s26 = ssub.s32 %s18, %s25
      %p27 = scmp.eq.s32.totalorder %s26, 0
      %s29 = sadd.s32 %s28, 1
      %s30 = scalar_select %p27, %s28, %s29
      %p33 = pneg %p27
      %p34 = scmp.eq.s32.totalorder %s18, 1
      %p35 = por %p33, %p34
      %p36 = scmp.ne.s32.totalorder %s28, %s31
      %p37 = scmp.eq.s32.totalorder %s18, 0
      %p38 = por %p36, %p37
      %p39 = scmp.ne.s32.totalorder %s28, %s31
      %p40 = scmp.eq.s32.totalorder %s23, 1
      %p41 = por %p39, %p40
      %p42 = scmp.ne.s32.totalorder %s31, %s32
      %p43 = scmp.eq.s32.totalorder %s23, 0
      %p44 = por %p42, %p43
      %p45 = scmp.ne.s32.totalorder %s31, %s32
      %p46 = scmp.eq.s32.totalorder %s24, 1
      %p47 = por %p45, %p46
      %p49 = scmp.ne.s32.totalorder %s32, %s48
      %p50 = scmp.eq.s32.totalorder %s24, 0
      %p51 = por %p49, %p50
      %s53 = sadd.s32 %s52, 1
      %p56 = scmp.eq.s32.totalorder %s18, 1
      %p57 = scmp.ne.s32.totalorder %s52, %s54
      %p58 = scmp.eq.s32.totalorder %s18, 0
      %p59 = por %p57, %p58
      %p60 = scmp.ne.s32.totalorder %s52, %s54
      %p61 = scmp.eq.s32.totalorder %s23, 1
      %p62 = por %p60, %p61
      %p63 = scmp.ne.s32.totalorder %s54, %s55
      %p64 = scmp.eq.s32.totalorder %s23, 0
      %p65 = por %p63, %p64
      %p66 = scmp.ne.s32.totalorder %s54, %s55
      %p67 = scmp.eq.s32.totalorder %s24, 1
      %p68 = por %p66, %p67
      %p70 = scmp.ne.s32.totalorder %s55, %s69
      %p71 = scmp.eq.s32.totalorder %s24, 0
      %p72 = por %p70, %p71
      %s74 = sadd.s32 %s73, 1
      %p77 = scmp.eq.s32.totalorder %s18, 1
      %p78 = scmp.ne.s32.totalorder %s73, %s75
      %p79 = scmp.eq.s32.totalorder %s18, 0
      %p80 = por %p78, %p79
      %p81 = scmp.ne.s32.totalorder %s73, %s75
      %p82 = scmp.eq.s32.totalorder %s23, 1
      %p83 = por %p81, %p82
      %p84 = scmp.ne.s32.totalorder %s75, %s76
      %p85 = scmp.eq.s32.totalorder %s23, 0
      %p86 = por %p84, %p85
      %p87 = scmp.ne.s32.totalorder %s75, %s76
      %p88 = scmp.eq.s32.totalorder %s24, 1
      %p89 = por %p87, %p88
      %p91 = scmp.ne.s32.totalorder %s76, %s90
      %p92 = scmp.eq.s32.totalorder %s24, 0
      %p93 = por %p91, %p92
      %s95 = sadd.s32 %s94, 1
      %p98 = scmp.eq.s32.totalorder %s18, 1
      %p99 = scmp.ne.s32.totalorder %s94, %s96
      %p100 = scmp.eq.s32.totalorder %s18, 0
      %p101 = por %p99, %p100
      %p102 = scmp.ne.s32.totalorder %s94, %s96
      %p103 = scmp.eq.s32.totalorder %s23, 1
      %p104 = por %p102, %p103
      %p105 = scmp.ne.s32.totalorder %s96, %s97
      %p106 = scmp.eq.s32.totalorder %s23, 0
      %p107 = por %p105, %p106
      %p108 = scmp.ne.s32.totalorder %s96, %s97
      %p109 = scmp.eq.s32.totalorder %s24, 1
      %p110 = por %p108, %p109
      %p112 = scmp.ne.s32.totalorder %s97, %s111
      %p113 = scmp.eq.s32.totalorder %s24, 0
      %p114 = por %p112, %p113
      %s116 = sadd.s32 %s115, 1
      %p119 = scmp.eq.s32.totalorder %s18, 1
      %p120 = scmp.ne.s32.totalorder %s115, %s117
      %p121 = scmp.eq.s32.totalorder %s18, 0
      %p122 = por %p120, %p121
      %p123 = scmp.ne.s32.totalorder %s115, %s117
      %p124 = scmp.eq.s32.totalorder %s23, 1
      %p125 = por %p123, %p124
      %p126 = scmp.ne.s32.totalorder %s117, %s118
      %p127 = scmp.eq.s32.totalorder %s23, 0
      %p128 = por %p126, %p127
      %p129 = scmp.ne.s32.totalorder %s117, %s118
      %p130 = scmp.eq.s32.totalorder %s24, 1
      %p131 = por %p129, %p130
      %p133 = scmp.ne.s32.totalorder %s118, %s132
      %p134 = scmp.eq.s32.totalorder %s24, 0
      %p135 = por %p133, %p134
      %s136 = ssub.s32 %s18, %s25
      %p137 = scmp.eq.s32.totalorder %s136, 0
      %s139 = sadd.s32 %s138, 1
      %s140 = scalar_select %p137, %s138, %s139
      %p143 = pneg %p137
      %p144 = scmp.eq.s32.totalorder %s18, 1
      %p145 = por %p143, %p144
      %p146 = scmp.ne.s32.totalorder %s138, %s141
      %p147 = scmp.eq.s32.totalorder %s18, 0
      %p148 = por %p146, %p147
      %p149 = scmp.ne.s32.totalorder %s138, %s141
      %p150 = scmp.eq.s32.totalorder %s23, 1
      %p151 = por %p149, %p150
      %p152 = scmp.ne.s32.totalorder %s141, %s142
      %p153 = scmp.eq.s32.totalorder %s23, 0
      %p154 = por %p152, %p153
      %p155 = scmp.ne.s32.totalorder %s141, %s142
      %p156 = scmp.eq.s32.totalorder %s24, 1
      %p157 = por %p155, %p156
      %p159 = scmp.ne.s32.totalorder %s142, %s158
      %p160 = scmp.eq.s32.totalorder %s24, 0
      %p161 = por %p159, %p160
      %p162 = scmp.le.s32.totalorder 1, %s18
      %p163 = scmp.lt.s32.totalorder %s18, 3
      %p164 = pnand %p162, %p163
      %p165 = pneg %p164
      // Predicated region
      $region9: #{tpu_custom_call.1} parent=5 // pred_check
        _
      $region10: #{tpu_custom_call.1} parent=5 // pred_check_branch
        %167 = sbr.rel (%p164) target = $region12
      $region11: #{tpu_custom_call.1} parent=5 // pred_region
        %s168 = ssub.s32 %s18, 1
        // Predicated region
        $region13: #{tpu_custom_call.1} parent=11 // pred_check
          %p169 = pneg %p65
        $region14: #{tpu_custom_call.1} parent=11 // pred_check_branch
          %171 = sbr.rel (%p169) target = $region16
        $region15: #{tpu_custom_call.1} parent=11 // pred_region
          %s173 = ssub.s32 32, 32
          %174 = vsyncadd [#allocation6], %s173
          %s176 = sshll.u32 [#allocation5], 4
          %s177 = int_to_ptr.vmem [resolvable:$true] %s176
          %179 = dma.hbm_to_vmem [thread:$0]  %s1, 32, %s177, [#allocation6]
        $region16: #{tpu_custom_call.1} parent=11 // pred_fallthru
          _
        // Predicated region
        $region17: #{tpu_custom_call.1} parent=11 // pred_check
          %p180 = pneg %p86
        $region18: #{tpu_custom_call.1} parent=11 // pred_check_branch
          %182 = sbr.rel (%p180) target = $region20
        $region19: #{tpu_custom_call.1} parent=11 // pred_region
          _
        $region20: #{tpu_custom_call.1} parent=11 // pred_fallthru
          _
        // Predicated region
        $region21: #{tpu_custom_call.1} parent=11 // pred_check
          %p183 = pneg %p107
        $region22: #{tpu_custom_call.1} parent=11 // pred_check_branch
          %185 = sbr.rel (%p183) target = $region24
        $region23: #{tpu_custom_call.1} parent=11 // pred_region
          _
        $region24: #{tpu_custom_call.1} parent=11 // pred_fallthru
          _
        // Predicated region
        $region25: #{tpu_custom_call.1} parent=11 // pred_check
          %p186 = pneg %p128
        $region26: #{tpu_custom_call.1} parent=11 // pred_check_branch
          %188 = sbr.rel (%p186) target = $region28
        $region27: #{tpu_custom_call.1} parent=11 // pred_region
          _
        $region28: #{tpu_custom_call.1} parent=11 // pred_fallthru
          _
      $region12: #{tpu_custom_call.1} parent=5 // pred_fallthru
        _
      %p189 = scmp.lt.s32.totalorder %s18, 2
      // Predicated region
      $region29: #{tpu_custom_call.1} parent=5 // pred_check
        %p190 = pneg %p189
      $region30: #{tpu_custom_call.1} parent=5 // pred_check_branch
        %192 = sbr.rel (%p190) target = $region32
      $region31: #{tpu_custom_call.1} parent=5 // pred_region
        // Predicated region
        $region33: #{tpu_custom_call.1} parent=31 // pred_check
          %p193 = pneg %p38
        $region34: #{tpu_custom_call.1} parent=31 // pred_check_branch
          %195 = sbr.rel (%p193) target = $region36
        $region35: #{tpu_custom_call.1} parent=31 // pred_region
          %s196 = sand.u32 %s28, 1
          %s197 = scalar_lea.sflag [#allocation3], %s196
          %s198 = sand.u32 %s28, 1
          %s199 = smul.addr %s198, 32
          %s200 = scalar_lea.vmem [#allocation2], %s199
          %s202 = ssub.s32 512, 512
          %203 = vsyncadd %s197, %s202
          %s204 = smul.addr %s18, 4
          %s205 = smul.addr %s204, 128
          %s206 = scalar_lea.hbm %s0, %s205
          %s207 = sshll.u32 %s200, 4
          %s208 = int_to_ptr.vmem [resolvable:$true] %s207
          %213 = dma.hbm_to_vmem [thread:$0]  %s206, 512, %s208, %s197, 256, 256, 16
        $region36: #{tpu_custom_call.1} parent=31 // pred_fallthru
          _
      $region32: #{tpu_custom_call.1} parent=5 // pred_fallthru
        _
      %p214 = scmp.le.s32.totalorder 1, %s18
      %p215 = scmp.lt.s32.totalorder %s18, 3
      %p216 = pnand %p214, %p215
      %p217 = pneg %p216
      // Predicated region
      $region37: #{tpu_custom_call.1} parent=5 // pred_check
        _
      $region38: #{tpu_custom_call.1} parent=5 // pred_check_branch
        %219 = sbr.rel (%p216) target = $region40
      $region39: #{tpu_custom_call.1} parent=5 // pred_region
        %s220 = ssub.s32 %s18, 1
        %s221 = sand.u32 %s31, 1
        %s222 = scalar_lea.sflag [#allocation3], %s221
        %s223 = sand.u32 %s31, 1
        %s224 = smul.addr %s223, 32
        %s225 = scalar_lea.vmem [#allocation2], %s224
        // Predicated region
        $region41: #{tpu_custom_call.1} parent=39 // pred_check
          %p226 = pneg %p44
        $region42: #{tpu_custom_call.1} parent=39 // pred_check_branch
          %228 = sbr.rel (%p226) target = $region44
        $region43: #{tpu_custom_call.1} parent=39 // pred_region
          %229 = dma.done %s222, 512
        $region44: #{tpu_custom_call.1} parent=39 // pred_fallthru
          _
        // Predicated region
        $region45: #{tpu_custom_call.1} parent=39 // pred_check
          %p230 = pneg %p65
        $region46: #{tpu_custom_call.1} parent=39 // pred_check_branch
          %232 = sbr.rel (%p230) target = $region48
        $region47: #{tpu_custom_call.1} parent=39 // pred_region
          %233 = dma.done [#allocation6], 32
        $region48: #{tpu_custom_call.1} parent=39 // pred_fallthru
          _
        %s234 = sand.u32 %s31, 1
        %s235 = scalar_lea.sflag [#allocation3], %s234
        %s236 = sand.u32 %s31, 1
        %s237 = smul.addr %s236, 32
        %s238 = scalar_lea.vmem [#allocation2], %s237
        %p239 = pneg %p44
        %p240 = pneg %p41
        %p241 = pneg %p65
        %p242 = pneg %p62
        %p243 = pneg %p86
        %p244 = pneg %p83
        %p245 = pneg %p107
        %p246 = pneg %p104
        %p247 = pneg %p128
        %p248 = pneg %p125
        %p249 = pneg %p154
        %p250 = pneg %p151
        %s251 = sand.u32 %s141, 1
        %s252 = scalar_lea.sflag [#allocation4], %s251
        %s253 = sand.u32 %s141, 1
        %s254 = smul.addr %s253, 32
        %s255 = scalar_lea.vmem [#allocation7], %s254
        %v256 = vld [vmem:[%s225] sm:$0xff]
        %v257 = vld [vmem:[%s225 + $0x8] sm:$0xff]
        %v258 = vld [vmem:[%s225 + $0x10] sm:$0xff]
        %v259 = vld [vmem:[%s225 + $0x18] sm:$0xff]
        %v260 = vadd.f32 %v256, %v257
        %261 = vadd.xlane.f32.xlu0 %v260
        %v262 = vpop.xlane.xlu0 %261
        %v263 = vadd.f32 %v258, %v259
        %264 = vadd.xlane.f32.xlu0 %v263
        %v265 = vpop.xlane.xlu0 %264
        %v266 = vmul.f32 %v262, 0.00390625
        %v267 = vmul.f32 %v265, 0.00390625
        %v268 = vld [vmem:[#allocation5] sm:$0x3]
        %v269 = vld [vmem:[%s2] sm:$0x1]
        %v270 = vld [vmem:[%s3] sm:$0x3]
        %v271 = vld [vmem:[%s4] sm:$0x1]
        %v273 = vlaneseq
        %v274 = vshrl.u32 %v273, 7
        %v275 = vsub.s32 0, %v274
        %v276 = vrot.slane %v268, %v275
        %278 = vbcast.lane.b32.xlu0 %v276, 256
        %v279 = vpop.permute.xlu0 %278
        %s281 = sor.u32 256, 8
        %282 = vbcast.lane.b32.xlu0 %v276, %s281
        %v283 = vpop.permute.xlu0 %282
        %v284 = vlaneseq
        %v285 = vshrl.u32 %v284, 7
        %v286 = vsub.s32 1, %v285
        %v287 = vrot.slane %v268, %v286
        %289 = vbcast.lane.b32.xlu0 %v287, 256
        %v290 = vpop.permute.xlu0 %289
        %s292 = sor.u32 256, 8
        %293 = vbcast.lane.b32.xlu0 %v287, %s292
        %v294 = vpop.permute.xlu0 %293
        %v299 = vmul.f32 %v266, %v279
        %v300 = vmul.f32 %v267, %v283
        %v301 = vmul.f32 %v266, %v290
        %v302 = vmul.f32 %v267, %v294
        %307 = vset.pattern.permute.xlu0 0
        %308 = vperm.xlu0 %307, %v299
        %v309 = vpop.permute.xlu0 %308
        %310 = vset.pattern.permute.xlu0 0
        %311 = vperm.xlu0 %310, %v300
        %v312 = vpop.permute.xlu0 %311
        %313 = vset.pattern.permute.xlu0 0
        %314 = vperm.xlu0 %313, %v301
        %v315 = vpop.permute.xlu0 %314
        %316 = vset.pattern.permute.xlu0 0
        %317 = vperm.xlu0 %316, %v302
        %v318 = vpop.permute.xlu0 %317
        %v319 = vlaneseq
        %v320 = vand.u32 %v319, 127
        %v321 = vlaneseq
        %v322 = vshrl.u32 %v321, 7
        %v323 = vsub.s32 %v320, %v322
        %v324 = vrot.slane %v309, %v323
        %v325 = vadd.s32 %v320, 4294967288
        %v326 = vlaneseq
        %v327 = vshrl.u32 %v326, 7
        %v328 = vsub.s32 %v325, %v327
        %v329 = vrot.slane %v312, %v328
        %vm330 = vcmask 130112
        %v331 = vsel %vm330, %v329, %v324
        %v332 = vlaneseq
        %v333 = vshrl.u32 %v332, 7
        %v334 = vsub.s32 %v320, %v333
        %v335 = vrot.slane %v315, %v334
        %v336 = vlaneseq
        %v337 = vshrl.u32 %v336, 7
        %v338 = vsub.s32 %v325, %v337
        %v339 = vrot.slane %v318, %v338
        %v340 = vsel %vm330, %v339, %v335
        %vm341 = vcmask 1041409
        %v342 = vsel %vm341, %v340, %v331
        %vm344 = vcmask 123904
        %v345 = vsel %vm344, %v342, 0.0
        %346 = vadd.xlane.f32.xlu0 %v345
        %v347 = vpop.xlane.xlu0 %346
        %v349 = vlaneseq
        %v350 = vshrl.u32 %v349, 7
        %v351 = vsub.s32 0, %v350
        %v352 = vrot.slane %v269, %v351
        %354 = vbcast.lane.b32.xlu0 %v352, 256
        %v355 = vpop.permute.xlu0 %354
        %v357 = vadd.f32 %v347, %v355
        %v358 = vmax.f32 %v357, 0.0
        %360 = vset.pattern.permute.xlu0 0
        %361 = vperm.xlu0 %360, %v358
        %v362 = vpop.permute.xlu0 %361
        %v364 = vmul.f32 %v362, %v270
        %v365 = vsel %vm344, %v364, 0.0
        %v366 = vrot.slane %v365, 4
        %v367 = vadd.f32 %v365, %v366
        %v368 = vrot.slane %v367, 2
        %v369 = vadd.f32 %v367, %v368
        %v370 = vrot.slane %v369, 1
        %v371 = vadd.f32 %v369, %v370
        %v372 = vadd.f32 %v371, %v271
        %v373 = vxor.u32 %v372, 2147483648
        %v374 = vmul.f32 %v373, 1.442695
        %v375 = vpow.pop %v374
        %v376 = vadd.f32 %v375, 1.0
        %v377 = vrcp.pop %v376
        %v378 = vmul.f32 1.0, %v377
        %v379 = vlaneseq
        %v380 = vshrl.u32 %v379, 7
        %v381 = vsub.s32 0, %v380
        %v382 = vrot.slane %v378, %v381
        %384 = vbcast.lane.b32.xlu0 %v382, 256
        %v385 = vpop.permute.xlu0 %384
        %s387 = sor.u32 256, 8
        %388 = vbcast.lane.b32.xlu0 %v382, %s387
        %v389 = vpop.permute.xlu0 %388
        %v390 = vmul.f32 %v256, %v385
        %v391 = vmul.f32 %v257, %v385
        %v392 = vmul.f32 %v258, %v389
        %v393 = vmul.f32 %v259, %v389
        %394 = vst [vmem:[%s255] sm:$0xff] %v390
        %395 = vst [vmem:[%s255 + $0x8] sm:$0xff] %v391
        %396 = vst [vmem:[%s255 + $0x10] sm:$0xff] %v392
        %397 = vst [vmem:[%s255 + $0x18] sm:$0xff] %v393
        %s398 = sand.u32 %s141, 1
        %s399 = scalar_lea.sflag [#allocation4], %s398
        %s400 = sand.u32 %s141, 1
        %s401 = smul.addr %s400, 32
        %s402 = scalar_lea.vmem [#allocation7], %s401
        // Predicated region
        $region49: #{tpu_custom_call.1} parent=39 // pred_check
          %p403 = pneg %p151
        $region50: #{tpu_custom_call.1} parent=39 // pred_check_branch
          %405 = sbr.rel (%p403) target = $region52
        $region51: #{tpu_custom_call.1} parent=39 // pred_region
          %s407 = ssub.s32 512, 512
          %408 = vsyncadd %s399, %s407
          %s409 = smul.addr %s23, 4
          %s410 = smul.addr %s409, 128
          %s411 = scalar_lea.hbm %s5, %s410
          %s412 = sshll.u32 %s402, 4
          %s413 = int_to_ptr.vmem [resolvable:$true] %s412
          %418 = dma.vmem_to_hbm [thread:$0]  %s413, 512, %s411, %s399, 256, 256, 16
        $region52: #{tpu_custom_call.1} parent=39 // pred_fallthru
          _
      $region40: #{tpu_custom_call.1} parent=5 // pred_fallthru
        _
      %p419 = scmp.le.s32.totalorder 2, %s18
      // Predicated region
      $region53: #{tpu_custom_call.1} parent=5 // pred_check
        %p420 = pneg %p419
      $region54: #{tpu_custom_call.1} parent=5 // pred_check_branch
        %422 = sbr.rel (%p420) target = $region56
      $region55: #{tpu_custom_call.1} parent=5 // pred_region
        %s423 = ssub.s32 %s18, 2
        // Predicated region
        $region57: #{tpu_custom_call.1} parent=55 // pred_check
          %p424 = pneg %p157
        $region58: #{tpu_custom_call.1} parent=55 // pred_check_branch
          %426 = sbr.rel (%p424) target = $region60
        $region59: #{tpu_custom_call.1} parent=55 // pred_region
          %s427 = sand.u32 %s142, 1
          %s428 = scalar_lea.sflag [#allocation4], %s427
          %s429 = sand.u32 %s142, 1
          %s430 = smul.addr %s429, 32
          %s431 = scalar_lea.vmem [#allocation7], %s430
          %432 = dma.done %s428, 512
        $region60: #{tpu_custom_call.1} parent=55 // pred_fallthru
          _
      $region56: #{tpu_custom_call.1} parent=5 // pred_fallthru
        _
    $region6: #{tpu_custom_call.1} parent=1 // loop_footer
      %s22 = sadd.s32 1, %s18
    $region7: #{tpu_custom_call.1} parent=1 // loop_footer_branch
      %17 = sbr.rel target = $region3
    $region8: #{tpu_custom_call.1} parent=1 // loop_exit
      _
    %433 = vsyncpa [#allocation3], 1
    %s434 = scalar_lea.sflag [#allocation3], 1
    %435 = vsyncpa %s434, 1
    %436 = vsyncpa [#allocation6], 1
    %437 = vsyncpa [#allocation4], 1
    %s438 = scalar_lea.sflag [#allocation4], 1
    %439 = vsyncpa %s438, 1

</llo_original>
